<compile_context>
chip_gen: v5e
topology: v5e:2x2
jax: 0.10.0
libtpu: 0.0.40
codegen_flags: <defaults>
</compile_context>

<pallas_src>
import numpy as np
import jax
import jax.numpy as jnp
from jax import lax
from jax.experimental import pallas as pl
from jax.experimental.pallas import tpu as pltpu

PATCH_LEN = 16
PATCH_DIM = 16 * 2   # 32
STRIDE = 8


# ---------------------------------------------------------------------------
# Generation-aware hardware knobs.
# ---------------------------------------------------------------------------
def _tpu_generation():
    kind = ""
    try:
        kind = (jax.devices()[0].device_kind or "").lower()
    except Exception:
        pass
    is_v7 = ("v7" in kind) or ("7x" in kind)
    mxu_k = 256 if (is_v7 or "v6" in kind) else 128      # native MXU contraction depth
    num_tc = 2 if is_v7 else 1                           # TensorCores per chip
    try:
        vmem_cap = int(pltpu.get_tpu_info().vmem_capacity_bytes)
    except Exception:
        vmem_cap = (64 << 20) if is_v7 else (128 << 20)
    # Raise the scoped-VMEM limit on v5e/v6e (128 MiB physical), stay
    # conservative on v7x (64 MiB physical); leave headroom for compiler scratch.
    vmem_limit = int(min(max(vmem_cap // 2, 32 << 20), 96 << 20))
    tile_budget = max(4 << 20, vmem_limit // 3)
    return mxu_k, num_tc, vmem_limit, tile_budget


def _pick_group(F, C, OUT, mxu_k):
    """Number of features folded into one block-diagonal MXU matmul."""
    if F * C <= 2048:
        return F                       # small case: one group, zero padding anywhere
    g = max(1, mxu_k // C)             # contraction depth ~ native MXU K
    while (g * C) % 128 or (g * OUT) % 128:
        g += 1                         # lane-dense x and output slabs per group
    return min(g, F)


# ---------------------------------------------------------------------------
# One-time folding / packing (hoisted out of the forward path).
# ---------------------------------------------------------------------------
def prepare_params(params, in_channels):
    """Fold unfold + patch_embed + fc[i] + proj[i] into a group-block-diagonal
    linear.  Returns (W_bd, b_flat, meta)."""
    We, be, Wfc, bfc, Wproj, bproj = params
    F = Wfc.shape[0]
    OUT = Wproj.shape[-1]
    C = in_channels
    P = (C - PATCH_LEN) // STRIDE + 1

    # Fold embed ∘ fc ∘ proj into a per-feature, per-patch (16, OUT) map.
    Wproj4 = Wproj.reshape(F, P, PATCH_DIM, OUT)             # p-major == torch Flatten
    A = jnp.einsum('ld,fde->fle', We, Wfc)                   # (F, 16, 32)
    M = jnp.einsum('fle,fpeo->fplo', A, Wproj4)              # (F, P, 16, OUT)
    c = jnp.einsum('d,fde->fe', be, Wfc) + bfc               # (F, 32)
    b_eff = bproj + jnp.einsum('fe,fpeo->fo', c, Wproj4)     # (F, OUT)

    # Fold the overlapping unfold via a static scatter matrix (single einsum,
    # no .at[...].add loop).
    S = np.zeros((P, PATCH_LEN, C), np.float32)
    for p in range(P):
        S[p, np.arange(PATCH_LEN), p * STRIDE + np.arange(PATCH_LEN)] = 1.0
    W_eff = jnp.einsum('fplo,plc->fco', M, jnp.asarray(S))   # (F, C, OUT)

    mxu_k, num_tc, vmem_limit, tile_budget = _tpu_generation()
    g = _pick_group(F, C, OUT, mxu_k)
    G = -(-F // g)
    F_pad = G * g
    if F_pad != F:                      # pad only the tiny weights/bias -- never x
        W_eff = jnp.pad(W_eff, ((0, F_pad - F), (0, 0), (0, 0)))
        b_eff = jnp.pad(b_eff, ((0, F_pad - F), (0, 0)))

    # (G, g, C, OUT) -> group-block-diagonal (G, g*C, g*OUT).
    Wg = W_eff.reshape(G, g, C, OUT)
    eye = jnp.eye(g, dtype=jnp.float32)
    W_bd = jnp.einsum('gico,ij->gicjo', Wg, eye).reshape(G, g * C, g * OUT)
    b_flat = b_eff.reshape(1, F_pad * OUT)

    meta = dict(F=F, F_pad=F_pad, C=C, OUT=OUT, g=g, G=G, num_tc=num_tc,
                vmem_limit=vmem_limit, tile_budget=tile_budget)
    return W_bd, b_flat, meta


def _groups_per_step(G, B, gC, gO, tile_budget, num_tc):
    per_group = 4 * (B * gC + gC * gO + gO + B * gO)    # f32 bytes: x + W + b + out
    tg = max(1, tile_budget // (2 * per_group))         # x2: double-buffered pipeline
    tg = int(min(tg, G, 8))                             # cap the in-kernel unroll
    if num_tc >= 2 and G >= 2:
        tg = min(tg, G // 2)                            # keep >= 2 grid steps for 2 TCs
    tg = max(1, tg)
    while G % tg:
        tg -= 1                                         # exact tiling, no group padding
    return tg


# ---------------------------------------------------------------------------
# Kernel: one (or a few) block-diagonal MXU matmuls per grid step.
# ---------------------------------------------------------------------------
def _make_kernel(total_x_lanes, block_x_lanes, ragged):
    def kernel(x_ref, w_ref, b_ref, out_ref):
        # x_ref  : (B, TG*gC)    lane-dense input slab
        # w_ref  : (TG, gC, gO)  group-block-diagonal folded weights
        # b_ref  : (1, TG*gO)    folded biases
        # out_ref: (B, TG*gO)    lane-dense output slab
        tg, gc, go = w_ref.shape
        if ragged:
            # Ragged tail block: zero the lanes past the real x extent so stale
            # VMEM contents cannot pollute valid output columns.
            start = pl.program_id(0) * block_x_lanes
            lane = lax.broadcasted_iota(jnp.int32, x_ref.shape, 1)
            xblk = jnp.where(lane < (total_x_lanes - start), x_ref[...], 0.0)
            get = lambda gi: xblk[:, gi * gc:(gi + 1) * gc]
        else:
            get = lambda gi: x_ref[:, gi * gc:(gi + 1) * gc]
        for gi in range(tg):            # small static unroll (tg <= 8)
            out_ref[:, gi * go:(gi + 1) * go] = (
                jnp.dot(get(gi), w_ref[gi], preferred_element_type=jnp.float32)
                + b_ref[:, gi * go:(gi + 1) * go])
    return kernel


def patch_block_forward(x, W_bd, b_flat, meta):
    """x: [B, F, C] float32; returns [B, F, out_channels]."""
    B, F, C = x.shape
    assert F == meta['F'] and C == meta['C']
    OUT, g, G, F_pad = meta['OUT'], meta['g'], meta['G'], meta['F_pad']
    gC, gO = g * C, g * OUT
    TG = _groups_per_step(G, B, gC, gO, meta['tile_budget'], meta['num_tc'])

    x_flat = x.reshape(B, F * C)        # free contiguous view, lane-dense

    out = pl.pallas_call(
        _make_kernel(F * C, TG * gC, F_pad != F),
        out_shape=jax.ShapeDtypeStruct((B, F_pad * OUT), jnp.float32),
        grid_spec=pltpu.PrefetchScalarGridSpec(
            num_scalar_prefetch=0,
            grid=(G // TG,),
            in_specs=[
                pl.BlockSpec((B, TG * gC), lambda i: (0, i)),
                pl.BlockSpec((TG, gC, gO), lambda i: (i, 0, 0)),
                pl.BlockSpec((1, TG * gO), lambda i: (0, i)),
            ],
            out_specs=pl.BlockSpec((B, TG * gO), lambda i: (0, i)),
        ),
        compiler_params=pltpu.CompilerParams(
            # Each grid step writes a disjoint output lane slab -> safely
            # parallel (splits across v7x's 2 TCs; neutral on v5e/v6e).
            dimension_semantics=("parallel",),
            vmem_limit_bytes=meta['vmem_limit'],
        ),
    )(x_flat, W_bd, b_flat)

    out = out.reshape(B, F_pad, OUT)    # free view, no transpose
    return out[:, :F, :] if F_pad != F else out


# ---------------------------------------------------------------------------
# Pure-JAX mirror of the PyTorch forward, for correctness checking.
# ---------------------------------------------------------------------------
def ref_forward(x, params):
    We, be, Wfc, bfc, Wproj, bproj = params
    B, F, C = x.shape
    P = (C - PATCH_LEN) // STRIDE + 1
    idx = jnp.arange(P)[:, None] * STRIDE + jnp.arange(PATCH_LEN)[None, :]
    xp = x[:, :, idx]                                     # (B, F, P, 16)
    emb = jnp.einsum('bfpl,ld->bfpd', xp, We) + be
    fc = jnp.einsum('bfpd,fde->bfpe', emb, Wfc) + bfc[None, :, None, :]
    flat = fc.reshape(B, F, P * PATCH_DIM)                # nn.Flatten(start_dim=-2)
    out = jnp.einsum('bfk,fko->bfo', flat, Wproj) + bproj[None, :, :]
    return out


if __name__ == "__main__":
    # Small shapes consistent with the module: in_channels=32 -> patch_num=3.
    B, F, C, OUT = 2, 4, 32, 8
    P = (C - PATCH_LEN) // STRIDE + 1

    key = jax.random.PRNGKey(0)
    ks = jax.random.split(key, 7)
    We = jax.random.normal(ks[0], (PATCH_LEN, PATCH_DIM), jnp.float32) * 0.1
    be = jax.random.normal(ks[1], (PATCH_DIM,), jnp.float32) * 0.1
    Wfc = jax.random.normal(ks[2], (F, PATCH_DIM, PATCH_DIM), jnp.float32) * 0.1
    bfc = jax.random.normal(ks[3], (F, PATCH_DIM), jnp.float32) * 0.1
    Wproj = jax.random.normal(ks[4], (F, PATCH_DIM * P, OUT), jnp.float32) * 0.1
    bproj = jax.random.normal(ks[5], (F, OUT), jnp.float32) * 0.1
    x = jax.random.normal(ks[6], (B, F, C), jnp.float32)
    params = (We, be, Wfc, bfc, Wproj, bproj)

    # Fold + pack ONCE (hoisted out of the forward path), then reuse.
    W_bd, b_flat, meta = prepare_params(params, C)
    W_bd, b_flat = jax.block_until_ready((W_bd, b_flat))

    fwd = jax.jit(lambda xx: patch_block_forward(xx, W_bd, b_flat, meta))
    out = jax.block_until_ready(fwd(x))
    ref = jax.block_until_ready(ref_forward(x, params))

    assert out.shape == (B, F, OUT), out.shape
    np.testing.assert_allclose(np.asarray(out), np.asarray(ref), rtol=1e-4, atol=1e-4)
    print("KERNEL_OK")
</pallas_src>

<mosaic_0001>
module attributes {stable_mosaic.version = 11 : i64} {
  func.func @kernel(%arg0: i32, %arg1: memref<2x128xf32, #tpu.memory_space<vmem>>, %arg2: memref<1x128x32xf32, #tpu.memory_space<vmem>>, %arg3: memref<1x32xf32, #tpu.memory_space<vmem>>, %arg4: memref<2x32xf32, #tpu.memory_space<vmem>>) attributes {dimension_semantics = [#tpu.dimension_semantics<parallel>], iteration_bounds = array<i64: 1>, scalar_prefetch = 0 : i64, scratch_operands = 0 : i64, tpu.core_type = #tpu.core_type<tc>, window_params = [{transform_indices = @transform_0, window_bounds = array<i64: 2, 128>}, {transform_indices = @transform_1, window_bounds = array<i64: 1, 128, 32>}, {transform_indices = @transform_2, window_bounds = array<i64: 1, 32>}, {transform_indices = @transform_3, window_bounds = array<i64: 2, 32>}]} {
    %c0 = arith.constant 0 : index
    %c0_0 = arith.constant 0 : index
    %0 = vector.load %arg1[%c0, %c0_0] : memref<2x128xf32, #tpu.memory_space<vmem>>, vector<2x128xf32>
    %c0_1 = arith.constant 0 : index
    %c0_2 = arith.constant 0 : index
    %c0_3 = arith.constant 0 : index
    %1 = vector.load %arg2[%c0_1, %c0_2, %c0_3] : memref<1x128x32xf32, #tpu.memory_space<vmem>>, vector<1x128x32xf32>
    %2 = vector.shape_cast %1 : vector<1x128x32xf32> to vector<128x32xf32>
    %cst = arith.constant dense<0.000000e+00> : vector<2x32xf32>
    %3 = tpu.matmul %0, %2, %cst {dimension_numbers = #tpu.dot_dimension_numbers<[1], [0], [0], [1], [0, 0, 1, 1], [], []>} : vector<2x128xf32>, vector<128x32xf32>, vector<2x32xf32> -> vector<2x32xf32>
    %c0_4 = arith.constant 0 : index
    %c0_5 = arith.constant 0 : index
    %4 = vector.load %arg3[%c0_4, %c0_5] : memref<1x32xf32, #tpu.memory_space<vmem>>, vector<1x32xf32>
    %5 = vector.broadcast %4 : vector<1x32xf32> to vector<2x32xf32>
    %6 = arith.addf %3, %5 : vector<2x32xf32>
    %c0_6 = arith.constant 0 : index
    %c0_7 = arith.constant 0 : index
    %7 = vector.load %arg4[%c0_6, %c0_7] : memref<2x32xf32, #tpu.memory_space<vmem>>, vector<2x32xf32>
    tpu.vector_store %arg4[%c0_6, %c0_7], %6 {strides = array<i32>} : memref<2x32xf32, #tpu.memory_space<vmem>>, vector<2x32xf32>,
    return
  }
  func.func @transform_0(%arg0: i32) -> (i32, i32) {
    %c0_i32 = arith.constant 0 : i32
    %c0_i32_0 = arith.constant 0 : i32
    return %c0_i32, %arg0 : i32, i32
  }
  func.func @transform_1(%arg0: i32) -> (i32, i32, i32) {
    %c0_i32 = arith.constant 0 : i32
    %c0_i32_0 = arith.constant 0 : i32
    %c0_i32_1 = arith.constant 0 : i32
    return %arg0, %c0_i32, %c0_i32_0 : i32, i32, i32
  }
  func.func @transform_2(%arg0: i32) -> (i32, i32) {
    %c0_i32 = arith.constant 0 : i32
    %c0_i32_0 = arith.constant 0 : i32
    return %c0_i32, %arg0 : i32, i32
  }
  func.func @transform_3(%arg0: i32) -> (i32, i32) {
    %c0_i32 = arith.constant 0 : i32
    %c0_i32_0 = arith.constant 0 : i32
    return %c0_i32, %arg0 : i32, i32
  }
}

</mosaic_0001>

<llo_original>
// kernel: _lambda_.1
$region0: #{_lambda_.1}
  #allocation0 [shape = 'u32[]', space=smem, size = 0x4, offset = 0x4, fixed_abs, tag = 'smem constant byte address 0x4 - core index']
  #allocation1 [shape = 'u32[72,128]{1,0:T(1,128)}', space=vmem, size = 0x9000, scoped, tag = 'internal scratch']
  %s0 = inlined_call_operand.vmem [shape: f32[2,128], index: 0, kind: input, shape index: {}]
  %s1 = inlined_call_operand.hbm [shape: f32[1,128,32], index: 1, kind: input, shape index: {}]
  %s2 = inlined_call_operand.vmem [shape: f32[1,32], index: 2, kind: input, shape index: {}]
  %s3 = inlined_call_operand.vmem [shape: f32[2,32], index: 3, kind: output, shape index: {}]
  %s4 = sld [smem:[#allocation0]]
  $region26: #{_lambda_.1} parent=0
    _
  %s6 = ssub.s32 1, %s4
  %s7 = scalar_select 0, %s6, %s4
  $region1: #{_lambda_.1} parent=0
    #allocation2 [shape = 'u8[65536]{0}', space=vmem, size = 0x10000, scoped, tag = 'input window, operand 1, single buffered']
    #allocation3 [shape = 's32[1]{0}', space=sflag, size = 0x4, scoped, tag = 'scoped memory for _lambda_.1']
    %8 = vsyncpa [#allocation3], 0
    // Predicated region
    $region2: #{_lambda_.1} parent=1 // pred_check
      _
    $region3: #{_lambda_.1} parent=1 // pred_check_branch
      %10 = sbr.rel (0) target = $region5
    $region4: #{_lambda_.1} parent=1 // pred_region
      _
    $region5: #{_lambda_.1} parent=1 // pred_fallthru
      _
    // Predicated region
    $region6: #{_lambda_.1} parent=1 // pred_check
      _
    $region7: #{_lambda_.1} parent=1 // pred_check_branch
      %12 = sbr.rel (0) target = $region9
    $region8: #{_lambda_.1} parent=1 // pred_region
      %14 = vsyncadd [#allocation3], 0
      %s15 = sshll.u32 %s1, 4
      %s16 = int_to_ptr.hbm [resolvable:$true] %s15
      %s17 = sshll.u32 [#allocation2], 4
      %s18 = int_to_ptr.vmem [resolvable:$true] %s17
      %23 = dma.hbm_to_vmem [thread:$0]  %s16, 2048, %s18, [#allocation3], 128, 128, 8
    $region9: #{_lambda_.1} parent=1 // pred_fallthru
      _
    // Predicated region
    $region10: #{_lambda_.1} parent=1 // pred_check
      _
    $region11: #{_lambda_.1} parent=1 // pred_check_branch
      %25 = sbr.rel (0) target = $region13
    $region12: #{_lambda_.1} parent=1 // pred_region
      _
    $region13: #{_lambda_.1} parent=1 // pred_fallthru
      _
    // Predicated region
    $region14: #{_lambda_.1} parent=1 // pred_check
      _
    $region15: #{_lambda_.1} parent=1 // pred_check_branch
      %27 = sbr.rel (0) target = $region17
    $region16: #{_lambda_.1} parent=1 // pred_region
      %29 = dma.done [#allocation3], 2048
    $region17: #{_lambda_.1} parent=1 // pred_fallthru
      _
    %v30 = vld [vmem:[%s0] sm:$0x3]
    %v31 = vld [vmem:[#allocation2] sm:$0xff]
    %v32 = vld [vmem:[#allocation2 + $0x8] sm:$0xff]
    %v33 = vld [vmem:[#allocation2 + $0x10] sm:$0xff]
    %v34 = vld [vmem:[#allocation2 + $0x18] sm:$0xff]
    %v35 = vld [vmem:[#allocation2 + $0x20] sm:$0xff]
    %v36 = vld [vmem:[#allocation2 + $0x28] sm:$0xff]
    %v37 = vld [vmem:[#allocation2 + $0x30] sm:$0xff]
    %v38 = vld [vmem:[#allocation2 + $0x38] sm:$0xff]
    %v39 = vld [vmem:[#allocation2 + $0x40] sm:$0xff]
    %v40 = vld [vmem:[#allocation2 + $0x48] sm:$0xff]
    %v41 = vld [vmem:[#allocation2 + $0x50] sm:$0xff]
    %v42 = vld [vmem:[#allocation2 + $0x58] sm:$0xff]
    %v43 = vld [vmem:[#allocation2 + $0x60] sm:$0xff]
    %v44 = vld [vmem:[#allocation2 + $0x68] sm:$0xff]
    %v45 = vld [vmem:[#allocation2 + $0x70] sm:$0xff]
    %v46 = vld [vmem:[#allocation2 + $0x78] sm:$0xff]
    %v47 = vld [vmem:[%s2] sm:$0x1]
    %v49 = vperm.slane %v47, 0
    %51 = vmatpush.msra.mxu0 %v46
    %52 = vmatpush.msra.mxu0 %v45
    %53 = vmatpush.msra.mxu0 %v44
    %54 = vmatpush.msra.mxu0 %v43
    %55 = vmatpush.msra.mxu0 %v42
    %56 = vmatpush.msra.mxu0 %v41
    %57 = vmatpush.msra.mxu0 %v40
    %58 = vmatpush.msra.mxu0 %v39
    %59 = vmatpush.msra.mxu0 %v38
    %60 = vmatpush.msra.mxu0 %v37
    %61 = vmatpush.msra.mxu0 %v36
    %62 = vmatpush.msra.mxu0 %v35
    %63 = vmatpush.msra.mxu0 %v34
    %64 = vmatpush.msra.mxu0 %v33
    %65 = vmatpush.msra.mxu0 %v32
    %66 = vmatpush.msra.mxu0 %v31
    %67 = vmatmul.f32.gmra.mxu0 %v30
    %v68 = vpop.f32.mrf.mxu0
    %v69 = vadd.f32 %v49, %v68
    %70 = vdwg.mxu0
    %vm71 = vcmask 254976
    %72 = vst.msk [vmem:[%s3] sm:$0x3] %vm71, %v69
    // Predicated region
    $region18: #{_lambda_.1} parent=1 // pred_check
      _
    $region19: #{_lambda_.1} parent=1 // pred_check_branch
      %74 = sbr.rel (0) target = $region21
    $region20: #{_lambda_.1} parent=1 // pred_region
      _
    $region21: #{_lambda_.1} parent=1 // pred_fallthru
      _
    // Predicated region
    $region22: #{_lambda_.1} parent=1 // pred_check
      _
    $region23: #{_lambda_.1} parent=1 // pred_check_branch
      %76 = sbr.rel (0) target = $region25
    $region24: #{_lambda_.1} parent=1 // pred_region
      _
    $region25: #{_lambda_.1} parent=1 // pred_fallthru
      _
    %77 = vsyncpa [#allocation3], 1

</llo_original>
